<compile_context>
chip_gen: v6e
topology: v6e:2x2x1
jax: 0.10.0
libtpu: 0.0.40
codegen_flags: <defaults>
</compile_context>

<pallas_src>
import functools

import jax
import jax.numpy as jnp
from jax.experimental import pallas as pl
from jax.experimental.pallas import tpu as pltpu

SUBLANE = 8  # f32 sublane count


def _pad_to(n, m):
    return ((n + m - 1) // m) * m


def make_mlp_kernel(num_layers, compute_dtype):
    """Fused MLP kernel: num_layers Linears, ReLU after all but the last."""

    def kernel(*refs):
        x_ref = refs[0]
        o_ref = refs[-1]
        wb_refs = refs[1:-1]
        # Cast the f32 activation tile to bf16 in-kernel (no wrapper-side cast/pad pass).
        h = x_ref[...].astype(compute_dtype)
        for li in range(num_layers):
            w_ref = wb_refs[2 * li]
            b_ref = wb_refs[2 * li + 1]
            # MXU matmul: bf16 x bf16 -> f32 accumulation.
            acc = jnp.dot(h, w_ref[...], preferred_element_type=jnp.float32)
            acc = acc + b_ref[...]                       # f32 bias add (VPU)
            if li < num_layers - 1:
                # ReLU, then drop back to bf16 so spills/VMEM traffic are half-width.
                h = jnp.maximum(acc, 0.0).astype(compute_dtype)
            else:
                o_ref[...] = acc.astype(o_ref.dtype)     # f32 output, natural width

    return kernel


def _choose_tm(batch, tm_max):
    """Pick a batch tile: big tiles amortize per-step overhead; >=2 steps for v7x megacore."""
    if batch > tm_max:
        return _pad_to(tm_max, SUBLANE)
    if batch >= 256:
        # Ensure the batch grid has >= 2 steps so both v7x TensorCores get work.
        return min(_pad_to(tm_max, SUBLANE), _pad_to((batch + 1) // 2, SUBLANE))
    # Single tile: block dim == full array dim is legal regardless of divisibility by 8.
    return batch


def qlearning_forward(x, params, *, compute_dtype=jnp.bfloat16, tm_max=4096):
    """x: (batch, input_size) f32; params: list of (W, b), W: (fan_in, fan_out), b: (1, fan_out).

    Returns (batch, output_size) f32, matching nn.Sequential(Linear, ReLU, ..., Linear).
    """
    batch, in_size = x.shape
    num_layers = len(params)
    out_size = params[-1][0].shape[1]

    tm = _choose_tm(batch, tm_max)
    grid = (pl.cdiv(batch, tm),)   # boundary blocks are masked; rows are independent

    # Weights in bf16 for the MXU (tiny, one-time cast), biases stay f32.
    flat_params = []
    in_specs = [pl.BlockSpec((tm, in_size), lambda i: (i, 0))]
    for (w, b) in params:
        fi, fo = w.shape
        flat_params.append(w.astype(compute_dtype))
        flat_params.append(b.reshape(1, fo).astype(jnp.float32))
        # Full-array blocks, same index every step -> resident in VMEM, DMA'd once.
        in_specs.append(pl.BlockSpec((fi, fo), lambda i: (0, 0)))
        in_specs.append(pl.BlockSpec((1, fo), lambda i: (0, 0)))

    out_specs = pl.BlockSpec((tm, out_size), lambda i: (i, 0))

    # Cost estimate from true (unpadded) dims.
    flops = 2 * batch * sum(w.shape[0] * w.shape[1] for (w, _) in params)
    bytes_accessed = (
        x.size * x.dtype.itemsize
        + sum(a.size * a.dtype.itemsize for a in flat_params)
        + batch * out_size * 4)

    return pl.pallas_call(
        make_mlp_kernel(num_layers, compute_dtype),
        out_shape=jax.ShapeDtypeStruct((batch, out_size), jnp.float32),
        grid=grid,
        in_specs=in_specs,
        out_specs=out_specs,
        compiler_params=pltpu.CompilerParams(
            dimension_semantics=("parallel",)),
        cost_estimate=pl.CostEstimate(flops=flops, transcendentals=0,
                                      bytes_accessed=bytes_accessed),
    )(x, *flat_params)


def init_params(key, input_size, num_neurons, complexity, output_size):
    """Deterministic init mimicking nn.Linear's U(-1/sqrt(fan_in), 1/sqrt(fan_in))."""
    dims = [input_size] + [num_neurons] * complexity + [output_size]
    params = []
    for i in range(len(dims) - 1):
        fan_in, fan_out = dims[i], dims[i + 1]
        key, kw, kb = jax.random.split(key, 3)
        bound = 1.0 / jnp.sqrt(jnp.float32(fan_in))
        w = jax.random.uniform(kw, (fan_in, fan_out), jnp.float32, -bound, bound)
        b = jax.random.uniform(kb, (1, fan_out), jnp.float32, -bound, bound)
        params.append((w, b))
    return params


def reference_forward(x, params, compute_dtype=jnp.bfloat16):
    """Pure-JAX reference with the same bf16-matmul-inputs / f32-accumulate numerics."""
    h = x
    n = len(params)
    for i, (w, b) in enumerate(params):
        h = jnp.dot(h.astype(compute_dtype), w.astype(compute_dtype),
                    preferred_element_type=jnp.float32) + b
        if i < n - 1:
            h = jnp.maximum(h, 0.0)
    return h


if __name__ == "__main__":
    # Module hyperparameters (small, consistent with the PyTorch module).
    num_neurons = 32
    complexity = 3        # -> 3 hidden Linear+ReLU layers, 1 output Linear
    input_size = 16
    output_size = 8
    batch = 2

    key = jax.random.PRNGKey(0)
    key, kx = jax.random.split(key)
    x = jax.random.normal(kx, (batch, input_size), jnp.float32)
    params = init_params(key, input_size, num_neurons, complexity, output_size)

    fwd = functools.partial(qlearning_forward, compute_dtype=jnp.bfloat16)

    # Small (batch=2) run: single grid step, full-array blocks.
    out = jax.block_until_ready(fwd(x, params))
    ref = reference_forward(x, params)
    assert out.shape == (batch, output_size)
    assert jnp.allclose(out, ref, atol=1e-3, rtol=1e-3), "mismatch vs pure-JAX reference"

    # Larger-batch run exercising multiple grid steps (tiled, double-buffered path).
    key, kx2 = jax.random.split(key)
    x_big = jax.random.normal(kx2, (64, input_size), jnp.float32)
    out_big = jax.block_until_ready(
        qlearning_forward(x_big, params, compute_dtype=jnp.bfloat16, tm_max=16))
    ref_big = reference_forward(x_big, params)
    assert out_big.shape == (64, output_size)
    assert jnp.allclose(out_big, ref_big, atol=1e-3, rtol=1e-3), \
        "mismatch vs pure-JAX reference (tiled batch)"

    # Non-divisible batch (boundary block masking) to exercise cdiv grid path.
    key, kx3 = jax.random.split(key)
    x_odd = jax.random.normal(kx3, (37, input_size), jnp.float32)
    out_odd = jax.block_until_ready(
        qlearning_forward(x_odd, params, compute_dtype=jnp.bfloat16, tm_max=16))
    ref_odd = reference_forward(x_odd, params)
    assert out_odd.shape == (37, output_size)
    assert jnp.allclose(out_odd, ref_odd, atol=1e-3, rtol=1e-3), \
        "mismatch vs pure-JAX reference (non-divisible batch)"

    print("KERNEL_OK")
</pallas_src>

<mosaic_0001>
module attributes {stable_mosaic.version = 11 : i64} {
  func.func @kernel(%arg0: i32, %arg1: memref<2x16xf32, #tpu.memory_space<vmem>>, %arg2: memref<16x32xbf16, #tpu.memory_space<vmem>>, %arg3: memref<1x32xf32, #tpu.memory_space<vmem>>, %arg4: memref<32x32xbf16, #tpu.memory_space<vmem>>, %arg5: memref<1x32xf32, #tpu.memory_space<vmem>>, %arg6: memref<32x32xbf16, #tpu.memory_space<vmem>>, %arg7: memref<1x32xf32, #tpu.memory_space<vmem>>, %arg8: memref<32x8xbf16, #tpu.memory_space<vmem>>, %arg9: memref<1x8xf32, #tpu.memory_space<vmem>>, %arg10: memref<2x8xf32, #tpu.memory_space<vmem>>) attributes {dimension_semantics = [#tpu.dimension_semantics<parallel>], iteration_bounds = array<i64: 1>, scalar_prefetch = 0 : i64, scratch_operands = 0 : i64, tpu.core_type = #tpu.core_type<tc>, window_params = [{transform_indices = @transform_0, window_bounds = array<i64: 2, 16>}, {pipeline_mode = #tpu.pipeline_mode<synchronous>, transform_indices = @transform_1, window_bounds = array<i64: 16, 32>}, {pipeline_mode = #tpu.pipeline_mode<synchronous>, transform_indices = @transform_2, window_bounds = array<i64: 1, 32>}, {pipeline_mode = #tpu.pipeline_mode<synchronous>, transform_indices = @transform_3, window_bounds = array<i64: 32, 32>}, {pipeline_mode = #tpu.pipeline_mode<synchronous>, transform_indices = @transform_4, window_bounds = array<i64: 1, 32>}, {pipeline_mode = #tpu.pipeline_mode<synchronous>, transform_indices = @transform_5, window_bounds = array<i64: 32, 32>}, {pipeline_mode = #tpu.pipeline_mode<synchronous>, transform_indices = @transform_6, window_bounds = array<i64: 1, 32>}, {pipeline_mode = #tpu.pipeline_mode<synchronous>, transform_indices = @transform_7, window_bounds = array<i64: 32, 8>}, {pipeline_mode = #tpu.pipeline_mode<synchronous>, transform_indices = @transform_8, window_bounds = array<i64: 1, 8>}, {transform_indices = @transform_9, window_bounds = array<i64: 2, 8>}]} {
    %c0 = arith.constant 0 : index
    %c0_0 = arith.constant 0 : index
    %0 = vector.load %arg1[%c0, %c0_0] : memref<2x16xf32, #tpu.memory_space<vmem>>, vector<2x16xf32>
    %1 = arith.truncf %0 : vector<2x16xf32> to vector<2x16xbf16>
    %c0_1 = arith.constant 0 : index
    %c0_2 = arith.constant 0 : index
    %2 = vector.load %arg2[%c0_1, %c0_2] : memref<16x32xbf16, #tpu.memory_space<vmem>>, vector<16x32xbf16>
    %cst = arith.constant dense<0.000000e+00> : vector<2x32xf32>
    %3 = tpu.matmul %1, %2, %cst {dimension_numbers = #tpu.dot_dimension_numbers<[1], [0], [0], [1], [0, 0, 1, 1], [], []>} : vector<2x16xbf16>, vector<16x32xbf16>, vector<2x32xf32> -> vector<2x32xf32>
    %c0_3 = arith.constant 0 : index
    %c0_4 = arith.constant 0 : index
    %4 = vector.load %arg3[%c0_3, %c0_4] : memref<1x32xf32, #tpu.memory_space<vmem>>, vector<1x32xf32>
    %5 = vector.broadcast %4 : vector<1x32xf32> to vector<2x32xf32>
    %6 = arith.addf %3, %5 : vector<2x32xf32>
    %cst_5 = arith.constant 0.000000e+00 : f32
    %7 = vector.broadcast %cst_5 : f32 to vector<2x32xf32>
    %8 = arith.maximumf %6, %7 : vector<2x32xf32>
    %9 = arith.truncf %8 : vector<2x32xf32> to vector<2x32xbf16>
    %c0_6 = arith.constant 0 : index
    %c0_7 = arith.constant 0 : index
    %10 = vector.load %arg4[%c0_6, %c0_7] : memref<32x32xbf16, #tpu.memory_space<vmem>>, vector<32x32xbf16>
    %cst_8 = arith.constant dense<0.000000e+00> : vector<2x32xf32>
    %11 = tpu.matmul %9, %10, %cst_8 {dimension_numbers = #tpu.dot_dimension_numbers<[1], [0], [0], [1], [0, 0, 1, 1], [], []>} : vector<2x32xbf16>, vector<32x32xbf16>, vector<2x32xf32> -> vector<2x32xf32>
    %c0_9 = arith.constant 0 : index
    %c0_10 = arith.constant 0 : index
    %12 = vector.load %arg5[%c0_9, %c0_10] : memref<1x32xf32, #tpu.memory_space<vmem>>, vector<1x32xf32>
    %13 = vector.broadcast %12 : vector<1x32xf32> to vector<2x32xf32>
    %14 = arith.addf %11, %13 : vector<2x32xf32>
    %cst_11 = arith.constant 0.000000e+00 : f32
    %15 = vector.broadcast %cst_11 : f32 to vector<2x32xf32>
    %16 = arith.maximumf %14, %15 : vector<2x32xf32>
    %17 = arith.truncf %16 : vector<2x32xf32> to vector<2x32xbf16>
    %c0_12 = arith.constant 0 : index
    %c0_13 = arith.constant 0 : index
    %18 = vector.load %arg6[%c0_12, %c0_13] : memref<32x32xbf16, #tpu.memory_space<vmem>>, vector<32x32xbf16>
    %cst_14 = arith.constant dense<0.000000e+00> : vector<2x32xf32>
    %19 = tpu.matmul %17, %18, %cst_14 {dimension_numbers = #tpu.dot_dimension_numbers<[1], [0], [0], [1], [0, 0, 1, 1], [], []>} : vector<2x32xbf16>, vector<32x32xbf16>, vector<2x32xf32> -> vector<2x32xf32>
    %c0_15 = arith.constant 0 : index
    %c0_16 = arith.constant 0 : index
    %20 = vector.load %arg7[%c0_15, %c0_16] : memref<1x32xf32, #tpu.memory_space<vmem>>, vector<1x32xf32>
    %21 = vector.broadcast %20 : vector<1x32xf32> to vector<2x32xf32>
    %22 = arith.addf %19, %21 : vector<2x32xf32>
    %cst_17 = arith.constant 0.000000e+00 : f32
    %23 = vector.broadcast %cst_17 : f32 to vector<2x32xf32>
    %24 = arith.maximumf %22, %23 : vector<2x32xf32>
    %25 = arith.truncf %24 : vector<2x32xf32> to vector<2x32xbf16>
    %c0_18 = arith.constant 0 : index
    %c0_19 = arith.constant 0 : index
    %26 = vector.load %arg8[%c0_18, %c0_19] : memref<32x8xbf16, #tpu.memory_space<vmem>>, vector<32x8xbf16>
    %cst_20 = arith.constant dense<0.000000e+00> : vector<2x8xf32>
    %27 = tpu.matmul %25, %26, %cst_20 {dimension_numbers = #tpu.dot_dimension_numbers<[1], [0], [0], [1], [0, 0, 1, 1], [], []>} : vector<2x32xbf16>, vector<32x8xbf16>, vector<2x8xf32> -> vector<2x8xf32>
    %c0_21 = arith.constant 0 : index
    %c0_22 = arith.constant 0 : index
    %28 = vector.load %arg9[%c0_21, %c0_22] : memref<1x8xf32, #tpu.memory_space<vmem>>, vector<1x8xf32>
    %29 = vector.broadcast %28 : vector<1x8xf32> to vector<2x8xf32>
    %30 = arith.addf %27, %29 : vector<2x8xf32>
    %c0_23 = arith.constant 0 : index
    %c0_24 = arith.constant 0 : index
    %31 = vector.load %arg10[%c0_23, %c0_24] : memref<2x8xf32, #tpu.memory_space<vmem>>, vector<2x8xf32>
    tpu.vector_store %arg10[%c0_23, %c0_24], %30 {strides = array<i32>} : memref<2x8xf32, #tpu.memory_space<vmem>>, vector<2x8xf32>,
    return
  }
  func.func @transform_0(%arg0: i32) -> (i32, i32) {
    %c0_i32 = arith.constant 0 : i32
    %c0_i32_0 = arith.constant 0 : i32
    return %arg0, %c0_i32 : i32, i32
  }
  func.func @transform_1(%arg0: i32) -> (i32, i32) {
    %c0_i32 = arith.constant 0 : i32
    %c0_i32_0 = arith.constant 0 : i32
    %c0_i32_1 = arith.constant 0 : i32
    return %c0_i32, %c0_i32_0 : i32, i32
  }
  func.func @transform_2(%arg0: i32) -> (i32, i32) {
    %c0_i32 = arith.constant 0 : i32
    %c0_i32_0 = arith.constant 0 : i32
    %c0_i32_1 = arith.constant 0 : i32
    return %c0_i32, %c0_i32_0 : i32, i32
  }
  func.func @transform_3(%arg0: i32) -> (i32, i32) {
    %c0_i32 = arith.constant 0 : i32
    %c0_i32_0 = arith.constant 0 : i32
    %c0_i32_1 = arith.constant 0 : i32
    return %c0_i32, %c0_i32_0 : i32, i32
  }
  func.func @transform_4(%arg0: i32) -> (i32, i32) {
    %c0_i32 = arith.constant 0 : i32
    %c0_i32_0 = arith.constant 0 : i32
    %c0_i32_1 = arith.constant 0 : i32
    return %c0_i32, %c0_i32_0 : i32, i32
  }
  func.func @transform_5(%arg0: i32) -> (i32, i32) {
    %c0_i32 = arith.constant 0 : i32
    %c0_i32_0 = arith.constant 0 : i32
    %c0_i32_1 = arith.constant 0 : i32
    return %c0_i32, %c0_i32_0 : i32, i32
  }
  func.func @transform_6(%arg0: i32) -> (i32, i32) {
    %c0_i32 = arith.constant 0 : i32
    %c0_i32_0 = arith.constant 0 : i32
    %c0_i32_1 = arith.constant 0 : i32
    return %c0_i32, %c0_i32_0 : i32, i32
  }
  func.func @transform_7(%arg0: i32) -> (i32, i32) {
    %c0_i32 = arith.constant 0 : i32
    %c0_i32_0 = arith.constant 0 : i32
    %c0_i32_1 = arith.constant 0 : i32
    return %c0_i32, %c0_i32_0 : i32, i32
  }
  func.func @transform_8(%arg0: i32) -> (i32, i32) {
    %c0_i32 = arith.constant 0 : i32
    %c0_i32_0 = arith.constant 0 : i32
    %c0_i32_1 = arith.constant 0 : i32
    return %c0_i32, %c0_i32_0 : i32, i32
  }
  func.func @transform_9(%arg0: i32) -> (i32, i32) {
    %c0_i32 = arith.constant 0 : i32
    %c0_i32_0 = arith.constant 0 : i32
    return %arg0, %c0_i32 : i32, i32
  }
}

</mosaic_0001>

<llo_original>
// kernel: tpu_custom_call.1
$region0: #{tpu_custom_call.1}
  #allocation0 [shape = 'u32[]', space=smem, size = 0x4, offset = 0x4, fixed_abs, tag = 'smem constant byte address 0x4 - core index']
  #allocation1 [shape = 'u32[144,128]{1,0:T(1,128)}', space=vmem, size = 0x12000, scoped, tag = 'internal scratch']
  %s0 = inlined_call_operand.hbm [shape: f32[2,16], index: 0, kind: input, shape index: {}]
  %s1 = inlined_call_operand.vmem [shape: bf16[16,32], index: 1, kind: input, shape index: {}]
  %s2 = inlined_call_operand.vmem [shape: f32[1,32], index: 2, kind: input, shape index: {}]
  %s3 = inlined_call_operand.vmem [shape: bf16[32,32], index: 3, kind: input, shape index: {}]
  %s4 = inlined_call_operand.hbm [shape: f32[1,32], index: 4, kind: input, shape index: {}]
  %s5 = inlined_call_operand.hbm [shape: bf16[32,32], index: 5, kind: input, shape index: {}]
  %s6 = inlined_call_operand.vmem [shape: f32[1,32], index: 6, kind: input, shape index: {}]
  %s7 = inlined_call_operand.vmem [shape: bf16[32,8], index: 7, kind: input, shape index: {}]
  %s8 = inlined_call_operand.vmem [shape: f32[1,8], index: 8, kind: input, shape index: {}]
  %s9 = inlined_call_operand.hbm [shape: f32[2,8], index: 9, kind: output, shape index: {}]
  %s10 = sld [smem:[#allocation0]]
  $region58: #{tpu_custom_call.1} parent=0
    _
  %s12 = ssub.s32 1, %s10
  %s13 = scalar_select 0, %s12, %s10
  $region1: #{tpu_custom_call.1} parent=0
    #allocation2 [shape = 'u8[1024]{0}', space=vmem, size = 0x400, scoped, tag = 'input window, operand 0, single buffered']
    #allocation3 [shape = 's32[1]{0}', space=sflag, size = 0x4, scoped, tag = 'scoped memory for tpu_custom_call.1']
    #allocation4 [shape = 's32[1]{0}', space=sflag, size = 0x4, scoped, tag = 'scoped memory for tpu_custom_call.1']
    #allocation5 [shape = 'u8[512]{0}', space=vmem, size = 0x400, scoped, tag = 'input window, operand 4, single buffered']
    #allocation6 [shape = 's32[1]{0}', space=sflag, size = 0x4, scoped, tag = 'scoped memory for tpu_custom_call.1']
    #allocation7 [shape = 'u8[8192]{0}', space=vmem, size = 0x2000, scoped, tag = 'input window, operand 5, single buffered']
    #allocation8 [shape = 'u8[1024]{0}', space=vmem, size = 0x400, scoped, tag = 'output window, operand 0, single buffered']
    %14 = vsyncpa [#allocation3], 0
    %15 = vsyncpa [#allocation6], 0
    %16 = vsyncpa [#allocation4], 0
    // Predicated region
    $region2: #{tpu_custom_call.1} parent=1 // pred_check
      _
    $region3: #{tpu_custom_call.1} parent=1 // pred_check_branch
      %18 = sbr.rel (0) target = $region5
    $region4: #{tpu_custom_call.1} parent=1 // pred_region
      %s20 = ssub.s32 32, 32
      %21 = vsyncadd [#allocation3], %s20
      %s23 = sshll.u32 [#allocation2], 4
      %s24 = int_to_ptr.vmem [resolvable:$true] %s23
      %26 = dma.hbm_to_vmem [thread:$0]  %s0, 32, %s24, [#allocation3]
    $region5: #{tpu_custom_call.1} parent=1 // pred_fallthru
      _
    // Predicated region
    $region6: #{tpu_custom_call.1} parent=1 // pred_check
      _
    $region7: #{tpu_custom_call.1} parent=1 // pred_check_branch
      %28 = sbr.rel (0) target = $region9
    $region8: #{tpu_custom_call.1} parent=1 // pred_region
      _
    $region9: #{tpu_custom_call.1} parent=1 // pred_fallthru
      _
    // Predicated region
    $region10: #{tpu_custom_call.1} parent=1 // pred_check
      _
    $region11: #{tpu_custom_call.1} parent=1 // pred_check_branch
      %30 = sbr.rel (0) target = $region13
    $region12: #{tpu_custom_call.1} parent=1 // pred_region
      _
    $region13: #{tpu_custom_call.1} parent=1 // pred_fallthru
      _
    // Predicated region
    $region14: #{tpu_custom_call.1} parent=1 // pred_check
      _
    $region15: #{tpu_custom_call.1} parent=1 // pred_check_branch
      %32 = sbr.rel (0) target = $region17
    $region16: #{tpu_custom_call.1} parent=1 // pred_region
      _
    $region17: #{tpu_custom_call.1} parent=1 // pred_fallthru
      _
    // Predicated region
    $region18: #{tpu_custom_call.1} parent=1 // pred_check
      _
    $region19: #{tpu_custom_call.1} parent=1 // pred_check_branch
      %34 = sbr.rel (0) target = $region21
    $region20: #{tpu_custom_call.1} parent=1 // pred_region
      %s36 = ssub.s32 16, 16
      %37 = vsyncadd [#allocation6], %s36
      %s39 = sshll.u32 [#allocation5], 4
      %s40 = int_to_ptr.vmem [resolvable:$true] %s39
      %42 = dma.hbm_to_vmem [thread:$0]  %s4, 16, %s40, [#allocation6]
    $region21: #{tpu_custom_call.1} parent=1 // pred_fallthru
      _
    // Predicated region
    $region22: #{tpu_custom_call.1} parent=1 // pred_check
      _
    $region23: #{tpu_custom_call.1} parent=1 // pred_check_branch
      %44 = sbr.rel (0) target = $region25
    $region24: #{tpu_custom_call.1} parent=1 // pred_region
      %s46 = ssub.s32 256, 256
      %47 = vsyncadd [#allocation6], %s46
      %s48 = sshll.u32 [#allocation7], 4
      %s49 = int_to_ptr.vmem [resolvable:$true] %s48
      %54 = dma.hbm_to_vmem [thread:$0]  %s5, 256, %s49, [#allocation6], 64, 64, 4
    $region25: #{tpu_custom_call.1} parent=1 // pred_fallthru
      _
    // Predicated region
    $region26: #{tpu_custom_call.1} parent=1 // pred_check
      _
    $region27: #{tpu_custom_call.1} parent=1 // pred_check_branch
      %56 = sbr.rel (0) target = $region29
    $region28: #{tpu_custom_call.1} parent=1 // pred_region
      _
    $region29: #{tpu_custom_call.1} parent=1 // pred_fallthru
      _
    // Predicated region
    $region30: #{tpu_custom_call.1} parent=1 // pred_check
      _
    $region31: #{tpu_custom_call.1} parent=1 // pred_check_branch
      %58 = sbr.rel (0) target = $region33
    $region32: #{tpu_custom_call.1} parent=1 // pred_region
      _
    $region33: #{tpu_custom_call.1} parent=1 // pred_fallthru
      _
    // Predicated region
    $region34: #{tpu_custom_call.1} parent=1 // pred_check
      _
    $region35: #{tpu_custom_call.1} parent=1 // pred_check_branch
      %60 = sbr.rel (0) target = $region37
    $region36: #{tpu_custom_call.1} parent=1 // pred_region
      _
    $region37: #{tpu_custom_call.1} parent=1 // pred_fallthru
      _
    // Predicated region
    $region38: #{tpu_custom_call.1} parent=1 // pred_check
      _
    $region39: #{tpu_custom_call.1} parent=1 // pred_check_branch
      %62 = sbr.rel (0) target = $region41
    $region40: #{tpu_custom_call.1} parent=1 // pred_region
      %63 = dma.done [#allocation3], 32
    $region41: #{tpu_custom_call.1} parent=1 // pred_fallthru
      _
    // Predicated region
    $region42: #{tpu_custom_call.1} parent=1 // pred_check
      _
    $region43: #{tpu_custom_call.1} parent=1 // pred_check_branch
      %65 = sbr.rel (0) target = $region45
    $region44: #{tpu_custom_call.1} parent=1 // pred_region
      %66 = dma.done [#allocation6], 16
    $region45: #{tpu_custom_call.1} parent=1 // pred_fallthru
      _
    // Predicated region
    $region46: #{tpu_custom_call.1} parent=1 // pred_check
      _
    $region47: #{tpu_custom_call.1} parent=1 // pred_check_branch
      %68 = sbr.rel (0) target = $region49
    $region48: #{tpu_custom_call.1} parent=1 // pred_region
      %69 = dma.done [#allocation6], 256
    $region49: #{tpu_custom_call.1} parent=1 // pred_fallthru
      _
    %v71 = vld [vmem:[#allocation2] sm:$0x3]
    %v72 = vpack.c.bf16 %v71, %v71
    %v73 = vld [vmem:[%s1] sm:$0xf]
    %v74 = vld [vmem:[%s1 + $0x4] sm:$0xf]
    %v75 = vld [vmem:[%s2] sm:$0x1]
    %v77 = vlaneseq
    %v78 = vshrl.u32 %v77, 7
    %v79 = vsub.s32 0, %v78
    %v80 = vrot.slane %v75, %v79
    %v84 = vunpack.c.l.b16 %v73
    %v85 = vunpack.c.l.b16 %v74
    %v86 = vpack.c.b16 %v85, %v84
    %vm88 = vcmask 130048
    %v90 = vsel %vm88, %v72, 0
    %92 = vmatprep.subr.bf16.mxu0 0
    %93 = vmatpush1.bf16.msra.mxu0 0
    %94 = vmatprep.subr.bf16.mxu0 0
    %95 = vmatpush1.bf16.msra.mxu0 0
    %96 = vmatprep.subr.bf16.mxu0 0
    %97 = vmatpush1.bf16.msra.mxu0 0
    %98 = vmatprep.subr.bf16.mxu0 0
    %99 = vmatpush1.bf16.msra.mxu0 0
    %100 = vmatprep.subr.bf16.mxu0 0
    %101 = vmatpush1.bf16.msra.mxu0 0
    %102 = vmatprep.subr.bf16.mxu0 0
    %103 = vmatpush1.bf16.msra.mxu0 0
    %104 = vmatprep.subr.bf16.mxu0 0
    %105 = vmatpush1.bf16.msra.mxu0 0
    %106 = vmatprep.subr.bf16.mxu0 0
    %107 = vmatpush1.bf16.msra.mxu0 %v86
    %108 = vmatprep.subr.bf16.mxu0 0
    %109 = vmatpush2.bf16.msra.mxu0 0
    %110 = vmatprep.subr.bf16.mxu0 0
    %111 = vmatpush2.bf16.msra.mxu0 0
    %112 = vmatprep.subr.bf16.mxu0 0
    %113 = vmatpush2.bf16.msra.mxu0 0
    %114 = vmatprep.subr.bf16.mxu0 0
    %115 = vmatpush2.bf16.msra.mxu0 0
    %116 = vmatprep.subr.bf16.mxu0 0
    %117 = vmatpush2.bf16.msra.mxu0 0
    %118 = vmatprep.subr.bf16.mxu0 0
    %119 = vmatpush2.bf16.msra.mxu0 0
    %120 = vmatprep.subr.bf16.mxu0 0
    %121 = vmatpush2.bf16.msra.mxu0 0
    %122 = vmatprep.subr.bf16.mxu0 0
    %123 = vmatpush2.bf16.msra.mxu0 0
    %124 = vmatprep.mubr.bf16.mxu0 0
    %125 = vmatmul.mubr.bf16.gmra.mxu0 %v90
    %v126 = vpop.f32.mrf.mxu0
    %v127 = vadd.f32 %v80, %v126
    %v128 = vpop.f32.mrf.mxu0
    %v129 = vpop.f32.mrf.mxu0
    %v130 = vpop.f32.mrf.mxu0
    %131 = vdwg.mxu0
    %v132 = vmax.f32 %v127, 0.0
    %v133 = vpack.c.bf16 %v132, %v132
    %v134 = vld [vmem:[%s3] sm:$0xf]
    %v135 = vld [vmem:[%s3 + $0x4] sm:$0xf]
    %v136 = vld [vmem:[%s3 + $0x8] sm:$0xf]
    %v137 = vld [vmem:[%s3 + $0xc] sm:$0xf]
    %v138 = vld [vmem:[#allocation5] sm:$0x1]
    %v140 = vlaneseq
    %v141 = vshrl.u32 %v140, 7
    %v142 = vsub.s32 0, %v141
    %v143 = vrot.slane %v138, %v142
    %v149 = vunpack.c.l.b16 %v134
    %v150 = vunpack.c.l.b16 %v135
    %v151 = vunpack.c.l.b16 %v136
    %v152 = vunpack.c.l.b16 %v137
    %v153 = vpack.c.b16 %v150, %v149
    %v154 = vpack.c.b16 %v152, %v151
    %vm157 = vcmask 261120
    %v159 = vsel %vm157, %v133, 0
    %161 = vmatprep.subr.bf16.mxu0 0
    %162 = vmatpush1.bf16.msra.mxu0 0
    %163 = vmatprep.subr.bf16.mxu0 0
    %164 = vmatpush1.bf16.msra.mxu0 0
    %165 = vmatprep.subr.bf16.mxu0 0
    %166 = vmatpush1.bf16.msra.mxu0 0
    %167 = vmatprep.subr.bf16.mxu0 0
    %168 = vmatpush1.bf16.msra.mxu0 0
    %169 = vmatprep.subr.bf16.mxu0 0
    %170 = vmatpush1.bf16.msra.mxu0 0
    %171 = vmatprep.subr.bf16.mxu0 0
    %172 = vmatpush1.bf16.msra.mxu0 0
    %173 = vmatprep.subr.bf16.mxu0 0
    %174 = vmatpush1.bf16.msra.mxu0 %v154
    %175 = vmatprep.subr.bf16.mxu0 0
    %176 = vmatpush1.bf16.msra.mxu0 %v153
    %177 = vmatprep.subr.bf16.mxu0 0
    %178 = vmatpush2.bf16.msra.mxu0 0
    %179 = vmatprep.subr.bf16.mxu0 0
    %180 = vmatpush2.bf16.msra.mxu0 0
    %181 = vmatprep.subr.bf16.mxu0 0
    %182 = vmatpush2.bf16.msra.mxu0 0
    %183 = vmatprep.subr.bf16.mxu0 0
    %184 = vmatpush2.bf16.msra.mxu0 0
    %185 = vmatprep.subr.bf16.mxu0 0
    %186 = vmatpush2.bf16.msra.mxu0 0
    %187 = vmatprep.subr.bf16.mxu0 0
    %188 = vmatpush2.bf16.msra.mxu0 0
    %189 = vmatprep.subr.bf16.mxu0 0
    %190 = vmatpush2.bf16.msra.mxu0 0
    %191 = vmatprep.subr.bf16.mxu0 0
    %192 = vmatpush2.bf16.msra.mxu0 0
    %193 = vmatprep.mubr.bf16.mxu0 0
    %194 = vmatmul.mubr.bf16.gmra.mxu0 %v159
    %v195 = vpop.f32.mrf.mxu0
    %v196 = vadd.f32 %v143, %v195
    %v197 = vpop.f32.mrf.mxu0
    %v198 = vpop.f32.mrf.mxu0
    %v199 = vpop.f32.mrf.mxu0
    %200 = vdwg.mxu0
    %v201 = vmax.f32 %v196, 0.0
    %v202 = vpack.c.bf16 %v201, %v201
    %v203 = vld [vmem:[#allocation7] sm:$0xf]
    %v204 = vld [vmem:[#allocation7 + $0x4] sm:$0xf]
    %v205 = vld [vmem:[#allocation7 + $0x8] sm:$0xf]
    %v206 = vld [vmem:[#allocation7 + $0xc] sm:$0xf]
    %v207 = vld [vmem:[%s6] sm:$0x1]
    %v209 = vlaneseq
    %v210 = vshrl.u32 %v209, 7
    %v211 = vsub.s32 0, %v210
    %v212 = vrot.slane %v207, %v211
    %v218 = vunpack.c.l.b16 %v203
    %v219 = vunpack.c.l.b16 %v204
    %v220 = vunpack.c.l.b16 %v205
    %v221 = vunpack.c.l.b16 %v206
    %v222 = vpack.c.b16 %v219, %v218
    %v223 = vpack.c.b16 %v221, %v220
    %v227 = vsel %vm157, %v202, 0
    %229 = vmatprep.subr.bf16.mxu0 0
    %230 = vmatpush1.bf16.msra.mxu0 0
    %231 = vmatprep.subr.bf16.mxu0 0
    %232 = vmatpush1.bf16.msra.mxu0 0
    %233 = vmatprep.subr.bf16.mxu0 0
    %234 = vmatpush1.bf16.msra.mxu0 0
    %235 = vmatprep.subr.bf16.mxu0 0
    %236 = vmatpush1.bf16.msra.mxu0 0
    %237 = vmatprep.subr.bf16.mxu0 0
    %238 = vmatpush1.bf16.msra.mxu0 0
    %239 = vmatprep.subr.bf16.mxu0 0
    %240 = vmatpush1.bf16.msra.mxu0 0
    %241 = vmatprep.subr.bf16.mxu0 0
    %242 = vmatpush1.bf16.msra.mxu0 %v223
    %243 = vmatprep.subr.bf16.mxu0 0
    %244 = vmatpush1.bf16.msra.mxu0 %v222
    %245 = vmatprep.subr.bf16.mxu0 0
    %246 = vmatpush2.bf16.msra.mxu0 0
    %247 = vmatprep.subr.bf16.mxu0 0
    %248 = vmatpush2.bf16.msra.mxu0 0
    %249 = vmatprep.subr.bf16.mxu0 0
    %250 = vmatpush2.bf16.msra.mxu0 0
    %251 = vmatprep.subr.bf16.mxu0 0
    %252 = vmatpush2.bf16.msra.mxu0 0
    %253 = vmatprep.subr.bf16.mxu0 0
    %254 = vmatpush2.bf16.msra.mxu0 0
    %255 = vmatprep.subr.bf16.mxu0 0
    %256 = vmatpush2.bf16.msra.mxu0 0
    %257 = vmatprep.subr.bf16.mxu0 0
    %258 = vmatpush2.bf16.msra.mxu0 0
    %259 = vmatprep.subr.bf16.mxu0 0
    %260 = vmatpush2.bf16.msra.mxu0 0
    %261 = vmatprep.mubr.bf16.mxu0 0
    %262 = vmatmul.mubr.bf16.gmra.mxu0 %v227
    %v263 = vpop.f32.mrf.mxu0
    %v264 = vadd.f32 %v212, %v263
    %v265 = vpop.f32.mrf.mxu0
    %v266 = vpop.f32.mrf.mxu0
    %v267 = vpop.f32.mrf.mxu0
    %268 = vdwg.mxu0
    %v269 = vmax.f32 %v264, 0.0
    %v270 = vpack.c.bf16 %v269, %v269
    %v271 = vld [vmem:[%s7] sm:$0xf]
    %v272 = vld [vmem:[%s7 + $0x4] sm:$0xf]
    %v273 = vld [vmem:[%s7 + $0x8] sm:$0xf]
    %v274 = vld [vmem:[%s7 + $0xc] sm:$0xf]
    %v275 = vld [vmem:[%s8] sm:$0x1]
    %v277 = vlaneseq
    %v278 = vshrl.u32 %v277, 7
    %v279 = vsub.s32 0, %v278
    %v280 = vrot.slane %v275, %v279
    %v286 = vunpack.c.l.b16 %v271
    %v287 = vunpack.c.l.b16 %v272
    %v288 = vunpack.c.l.b16 %v273
    %v289 = vunpack.c.l.b16 %v274
    %v290 = vpack.c.b16 %v287, %v286
    %v291 = vpack.c.b16 %v289, %v288
    %v295 = vsel %vm157, %v270, 0
    %297 = vmatprep.subr.bf16.mxu0 0
    %298 = vmatpush1.bf16.msra.mxu0 0
    %299 = vmatprep.subr.bf16.mxu0 0
    %300 = vmatpush1.bf16.msra.mxu0 0
    %301 = vmatprep.subr.bf16.mxu0 0
    %302 = vmatpush1.bf16.msra.mxu0 0
    %303 = vmatprep.subr.bf16.mxu0 0
    %304 = vmatpush1.bf16.msra.mxu0 0
    %305 = vmatprep.subr.bf16.mxu0 0
    %306 = vmatpush1.bf16.msra.mxu0 0
    %307 = vmatprep.subr.bf16.mxu0 0
    %308 = vmatpush1.bf16.msra.mxu0 0
    %309 = vmatprep.subr.bf16.mxu0 0
    %310 = vmatpush1.bf16.msra.mxu0 %v291
    %311 = vmatprep.subr.bf16.mxu0 0
    %312 = vmatpush1.bf16.msra.mxu0 %v290
    %313 = vmatprep.subr.bf16.mxu0 0
    %314 = vmatpush2.bf16.msra.mxu0 0
    %315 = vmatprep.subr.bf16.mxu0 0
    %316 = vmatpush2.bf16.msra.mxu0 0
    %317 = vmatprep.subr.bf16.mxu0 0
    %318 = vmatpush2.bf16.msra.mxu0 0
    %319 = vmatprep.subr.bf16.mxu0 0
    %320 = vmatpush2.bf16.msra.mxu0 0
    %321 = vmatprep.subr.bf16.mxu0 0
    %322 = vmatpush2.bf16.msra.mxu0 0
    %323 = vmatprep.subr.bf16.mxu0 0
    %324 = vmatpush2.bf16.msra.mxu0 0
    %325 = vmatprep.subr.bf16.mxu0 0
    %326 = vmatpush2.bf16.msra.mxu0 0
    %327 = vmatprep.subr.bf16.mxu0 0
    %328 = vmatpush2.bf16.msra.mxu0 0
    %329 = vmatprep.mubr.bf16.mxu0 0
    %330 = vmatmul.mubr.bf16.gmra.mxu0 %v295
    %v331 = vpop.f32.mrf.mxu0
    %v332 = vadd.f32 %v280, %v331
    %v333 = vpop.f32.mrf.mxu0
    %v334 = vpop.f32.mrf.mxu0
    %v335 = vpop.f32.mrf.mxu0
    %336 = vdwg.mxu0
    %vm337 = vcmask 58368
    %338 = vst.msk [vmem:[#allocation8] sm:$0x3] %vm337, %v332
    // Predicated region
    $region50: #{tpu_custom_call.1} parent=1 // pred_check
      _
    $region51: #{tpu_custom_call.1} parent=1 // pred_check_branch
      %340 = sbr.rel (0) target = $region53
    $region52: #{tpu_custom_call.1} parent=1 // pred_region
      %s342 = ssub.s32 32, 32
      %343 = vsyncadd [#allocation4], %s342
      %s345 = sshll.u32 [#allocation8], 4
      %s346 = int_to_ptr.vmem [resolvable:$true] %s345
      %348 = dma.vmem_to_hbm [thread:$0]  %s346, 32, %s9, [#allocation4]
    $region53: #{tpu_custom_call.1} parent=1 // pred_fallthru
      _
    // Predicated region
    $region54: #{tpu_custom_call.1} parent=1 // pred_check
      _
    $region55: #{tpu_custom_call.1} parent=1 // pred_check_branch
      %350 = sbr.rel (0) target = $region57
    $region56: #{tpu_custom_call.1} parent=1 // pred_region
      %351 = dma.done [#allocation4], 32
    $region57: #{tpu_custom_call.1} parent=1 // pred_fallthru
      _
    %352 = vsyncpa [#allocation3], 1
    %353 = vsyncpa [#allocation6], 1
    %354 = vsyncpa [#allocation4], 1

</llo_original>
